<compile_context>
chip_gen: v6e
topology: v6e:2x2x1
jax: 0.10.0
libtpu: 0.0.40
codegen_flags: <defaults>
</compile_context>

<pallas_src>
from functools import partial

import jax
import jax.numpy as jnp
from jax import lax
from jax.experimental import pallas as pl
from jax.experimental.pallas import tpu as pltpu

STORE_DTYPE = jnp.bfloat16   # HBM storage for the big spatial arrays (halves DMA)
MXU_DTYPE = jnp.bfloat16     # matmul input dtype; accumulation stays f32


def _mm(a, b):
    return jnp.dot(a.astype(MXU_DTYPE), b.astype(MXU_DTYPE),
                   preferred_element_type=jnp.float32)


def _prelu(x, a):
    # PyTorch PReLU: x if x >= 0 else a * x (per-channel slope a, shape (C,1)).
    return jnp.where(x >= 0.0, x, x * a)


def depth_wise_kernel(wo, x_ref, w1_ref, b1_ref, a1_ref, wd_ref, b2_ref,
                      a2_ref, w3_ref, b3_ref, mask_ref, o_ref):
    """One batch image.

    x_ref  : (1, 4*Cin, Sp) bf16 -- the four parity planes (ee, eo, oe, oo)
             of x stacked on the sublane axis; spatial flattened to
             so = oy*Wo + ox on the lane axis and zero-padded to Sp (128*k).
    w1_ref : (4*G, 4*Cin) block-diagonal 1x1-conv weight (BN1 scale folded).
    b1_ref, a1_ref : (4*G, 1) BN1 bias / PReLU1 slope (tiled over planes).
    wd_ref : (9, G, 1) depthwise 3x3 weight, tap-major (t = 3*dy + dx),
             BN2 scale folded.
    b2_ref, a2_ref : (G, 1) BN2 bias / PReLU2 slope.
    w3_ref : (Cout, G) 1x1 projection weight (BN3 scale folded).
    b3_ref : (Cout, 1) BN3 bias.
    mask_ref : (3, Sp) {0,1} f32 masks: [ox==0 cols, oy==0 row, corner].
    o_ref  : (1, Cout, Sp) bf16 output (lane-dense store).
    """
    G = b2_ref.shape[0]

    # ---- 1x1 conv (+folded BN1) for all four parity planes: one MXU matmul.
    z = _mm(w1_ref[...], x_ref[0]) + b1_ref[...]            # (4G, Sp) f32
    act = _prelu(z, a1_ref[...])

    # Parity-plane views (sublane slices at multiples of G).
    p_ee, p_eo = act[0 * G:1 * G], act[1 * G:2 * G]
    p_oe, p_oo = act[2 * G:3 * G], act[3 * G:4 * G]

    m = mask_ref[...]
    m_col, m_row, m_cor = m[0:1, :], m[1:2, :], m[2:3, :]
    w = wd_ref[...]                                         # (9, G, 1), hoisted

    # ---- depthwise 3x3 / stride 2: every tap is a lane roll of a parity
    # plane (pltpu.roll == jnp.roll: result[i] = src[i - shift]).  The conv's
    # zero padding only affects the oy==0 / ox==0 taps, handled by the three
    # precomputed masks; roll wrap-around only ever lands on masked lanes, so
    # no pre-zeroing of the lane-pad region is needed.  Pairwise tree keeps
    # the VPU dependency chain short (no f32 FMA on v6e).
    in_place = w[4] * p_ee + w[5] * p_eo + w[7] * p_oe + w[8] * p_oo
    top_row = (w[1] * pltpu.roll(p_oe, wo, axis=1)
               + w[2] * pltpu.roll(p_oo, wo, axis=1)) * m_row
    left_col = (w[3] * pltpu.roll(p_eo, 1, axis=1)
                + w[6] * pltpu.roll(p_oo, 1, axis=1)) * m_col
    corner = (w[0] * pltpu.roll(p_oo, wo + 1, axis=1)) * m_cor
    dw = (in_place + top_row) + (left_col + corner)         # (G, Sp) f32

    # ---- BN2 bias + PReLU2, then 1x1 projection (+folded BN3).
    act2 = _prelu(dw + b2_ref[...], a2_ref[...])
    out = _mm(w3_ref[...], act2) + b3_ref[...]              # (Cout, Sp) f32
    o_ref[0] = out.astype(o_ref.dtype)


def _bn_fold(gamma, beta, mean, var, eps):
    scale = gamma / jnp.sqrt(var + eps)
    return scale, beta - mean * scale


def depth_wise_pallas(x_nchw, params, eps=1e-5, residual=False):
    """Depth_Wise forward (inference / eval-mode BatchNorm), default config
    kernel=(3,3), stride=(2,2), padding=(1,1).  x_nchw: (B, in_c, H, W)."""
    # TODO(synk): residual=True (stride-1 shortcut) and train-mode BN batch
    # statistics are not implemented; this covers the module's default config.
    assert not residual, "residual=True (stride 1) variant not implemented"
    B, Cin, H, W = x_nchw.shape
    assert H % 2 == 0 and W % 2 == 0, "stride-2 kernel assumes even H, W"
    G = params["w1"].shape[0]            # groups (hidden channels)
    Cout = params["w3"].shape[0]
    Ho, Wo = H // 2, W // 2
    So = Ho * Wo
    Sp = ((So + 127) // 128) * 128       # lane-dense flattened output spatial

    # ---- fold eval-mode BatchNorm into the bias-free conv weights ----------
    s1, b1 = _bn_fold(params["bn1_g"], params["bn1_b"], params["bn1_m"],
                      params["bn1_v"], eps)
    w1 = params["w1"][:, :, 0, 0] * s1[:, None]                    # (G, Cin)
    s2, b2 = _bn_fold(params["bn2_g"], params["bn2_b"], params["bn2_m"],
                      params["bn2_v"], eps)
    wd = params["wd"][:, 0, :, :] * s2[:, None, None]              # (G, 3, 3)
    s3, b3 = _bn_fold(params["bn3_g"], params["bn3_b"], params["bn3_m"],
                      params["bn3_v"], eps)
    w3 = params["w3"][:, :, 0, 0] * s3[:, None]                    # (Cout, G)

    # Block-diagonal conv1 weight: one matmul covers all four parity planes
    # while the x DMA block stays fully sublane-dense (4*Cin rows).
    w1bd = jnp.kron(jnp.eye(4, dtype=w1.dtype), w1)                # (4G, 4Cin)
    b1t = jnp.tile(b1, 4).reshape(4 * G, 1)
    a1t = jnp.tile(params["prelu1_a"], 4).reshape(4 * G, 1)
    wd9 = wd.reshape(G, 9).T.reshape(9, G, 1)                      # tap-major
    b2c = b2.reshape(G, 1)
    a2c = params["prelu2_a"].reshape(G, 1)
    b3c = b3.reshape(Cout, 1)

    # ---- single wrapper re-layout: (row,col) parity split of x -------------
    # Plane p in {ee, eo, oe, oo}: P_p[:, c, oy*Wo+ox] = x[:, c, 2*oy+pr, 2*ox+pc].
    # The four planes tile x exactly once (no duplicated tap plane, no halo).
    planes = jnp.stack(
        [x_nchw[:, :, 0::2, 0::2], x_nchw[:, :, 0::2, 1::2],
         x_nchw[:, :, 1::2, 0::2], x_nchw[:, :, 1::2, 1::2]], axis=1)
    planes = planes.reshape(B, 4 * Cin, So)
    planes = jnp.pad(planes, ((0, 0), (0, 0), (0, Sp - So)))
    planes = planes.astype(STORE_DTYPE)

    # Border masks: with stride 2 / pad 1 / even H,W only the left (ox==0) and
    # top (oy==0) taps ever touch the zero padding.
    so_idx = jnp.arange(Sp)
    m_col = (so_idx % Wo) != 0
    m_row = so_idx >= Wo
    masks = jnp.stack([m_col, m_row, m_col & m_row]).astype(jnp.float32)

    def _full(shape):
        return pl.BlockSpec(shape, lambda b: (0,) * len(shape))

    out = pl.pallas_call(
        partial(depth_wise_kernel, Wo),
        out_shape=jax.ShapeDtypeStruct((B, Cout, Sp), STORE_DTYPE),
        grid=(B,),
        in_specs=[
            pl.BlockSpec((1, 4 * Cin, Sp), lambda b: (b, 0, 0)),
            _full((4 * G, 4 * Cin)),
            _full((4 * G, 1)),
            _full((4 * G, 1)),
            _full((9, G, 1)),
            _full((G, 1)),
            _full((G, 1)),
            _full((Cout, G)),
            _full((Cout, 1)),
            _full((3, Sp)),
        ],
        out_specs=pl.BlockSpec((1, Cout, Sp), lambda b: (b, 0, 0)),
        compiler_params=pltpu.CompilerParams(
            dimension_semantics=("parallel",),
            vmem_limit_bytes=32 * 1024 * 1024),
    )(planes, w1bd, b1t, a1t, wd9, b2c, a2c, w3, b3c, masks)

    out = out[:, :, :So].reshape(B, Cout, Ho, Wo)   # drop lane pad; already NCHW
    return out.astype(x_nchw.dtype)


def depth_wise_reference(x, params, eps=1e-5):
    """Pure-JAX NCHW reference mirroring the PyTorch module (eval-mode BN)."""
    dn = ("NCHW", "OIHW", "NCHW")
    G = params["w1"].shape[0]

    def bn(y, g, b, m, v):
        inv = g / jnp.sqrt(v + eps)
        return y * inv[None, :, None, None] + (b - m * inv)[None, :, None, None]

    def prelu(y, a):
        return jnp.where(y >= 0, y, y * a[None, :, None, None])

    y = lax.conv_general_dilated(x, params["w1"], (1, 1), "VALID",
                                 dimension_numbers=dn,
                                 precision=lax.Precision.HIGHEST)
    y = prelu(bn(y, params["bn1_g"], params["bn1_b"], params["bn1_m"],
                 params["bn1_v"]), params["prelu1_a"])
    y = lax.conv_general_dilated(y, params["wd"], (2, 2), ((1, 1), (1, 1)),
                                 dimension_numbers=dn, feature_group_count=G,
                                 precision=lax.Precision.HIGHEST)
    y = prelu(bn(y, params["bn2_g"], params["bn2_b"], params["bn2_m"],
                 params["bn2_v"]), params["prelu2_a"])
    y = lax.conv_general_dilated(y, params["w3"], (1, 1), "VALID",
                                 dimension_numbers=dn,
                                 precision=lax.Precision.HIGHEST)
    return bn(y, params["bn3_g"], params["bn3_b"], params["bn3_m"],
              params["bn3_v"])


if __name__ == "__main__":
    B, Cin, H, W = 2, 4, 16, 16
    G, Cout = 8, 8                       # Depth_Wise(groups=8, out_c=8)

    key = jax.random.PRNGKey(0)
    ks = jax.random.split(key, 20)
    x = jax.random.normal(ks[0], (B, Cin, H, W), jnp.float32)

    def bn_params(i, c):
        return dict(
            g=1.0 + 0.1 * jax.random.normal(ks[i], (c,), jnp.float32),
            b=0.1 * jax.random.normal(ks[i + 1], (c,), jnp.float32),
            m=0.1 * jax.random.normal(ks[i + 2], (c,), jnp.float32),
            v=1.0 + 0.5 * jax.random.uniform(ks[i + 3], (c,), jnp.float32))

    bn1, bn2, bn3 = bn_params(4, G), bn_params(8, G), bn_params(12, Cout)
    params = {
        "w1": 0.3 * jax.random.normal(ks[1], (G, Cin, 1, 1), jnp.float32),
        "wd": 0.3 * jax.random.normal(ks[2], (G, 1, 3, 3), jnp.float32),
        "w3": 0.3 * jax.random.normal(ks[3], (Cout, G, 1, 1), jnp.float32),
        "prelu1_a": 0.25 + 0.1 * jax.random.normal(ks[16], (G,), jnp.float32),
        "prelu2_a": 0.25 + 0.1 * jax.random.normal(ks[17], (G,), jnp.float32),
        "bn1_g": bn1["g"], "bn1_b": bn1["b"], "bn1_m": bn1["m"], "bn1_v": bn1["v"],
        "bn2_g": bn2["g"], "bn2_b": bn2["b"], "bn2_m": bn2["m"], "bn2_v": bn2["v"],
        "bn3_g": bn3["g"], "bn3_b": bn3["b"], "bn3_m": bn3["m"], "bn3_v": bn3["v"],
    }

    out = depth_wise_pallas(x, params)
    out = jax.block_until_ready(out)

    ref = depth_wise_reference(x, params)
    max_err = float(jnp.max(jnp.abs(out - ref)))
    assert out.shape == (B, Cout, H // 2, W // 2), out.shape
    # bf16 HBM storage + bf16 MXU inputs (f32 accumulation, f32 VPU math):
    # expected max abs error ~1-2% of the O(0.3) output scale.
    assert max_err < 5e-2, f"mismatch vs reference: {max_err}"

    print("KERNEL_OK")
</pallas_src>

<mosaic_0001>
module attributes {stable_mosaic.version = 11 : i64} {
  func.func @depth_wise_kernel(%arg0: i32, %arg1: memref<1x16x128xbf16, #tpu.memory_space<vmem>>, %arg2: memref<32x16xf32, #tpu.memory_space<vmem>>, %arg3: memref<32x1xf32, #tpu.memory_space<vmem>>, %arg4: memref<32x1xf32, #tpu.memory_space<vmem>>, %arg5: memref<9x8x1xf32, #tpu.memory_space<vmem>>, %arg6: memref<8x1xf32, #tpu.memory_space<vmem>>, %arg7: memref<8x1xf32, #tpu.memory_space<vmem>>, %arg8: memref<8x8xf32, #tpu.memory_space<vmem>>, %arg9: memref<8x1xf32, #tpu.memory_space<vmem>>, %arg10: memref<3x128xf32, #tpu.memory_space<vmem>>, %arg11: memref<1x8x128xbf16, #tpu.memory_space<vmem>>) attributes {dimension_semantics = [#tpu.dimension_semantics<parallel>], iteration_bounds = array<i64: 2>, scalar_prefetch = 0 : i64, scratch_operands = 0 : i64, tpu.core_type = #tpu.core_type<tc>, window_params = [{transform_indices = @transform_0, window_bounds = array<i64: 1, 16, 128>}, {pipeline_mode = #tpu.pipeline_mode<synchronous>, transform_indices = @transform_1, window_bounds = array<i64: 32, 16>}, {pipeline_mode = #tpu.pipeline_mode<synchronous>, transform_indices = @transform_2, window_bounds = array<i64: 32, 1>}, {pipeline_mode = #tpu.pipeline_mode<synchronous>, transform_indices = @transform_3, window_bounds = array<i64: 32, 1>}, {pipeline_mode = #tpu.pipeline_mode<synchronous>, transform_indices = @transform_4, window_bounds = array<i64: 9, 8, 1>}, {pipeline_mode = #tpu.pipeline_mode<synchronous>, transform_indices = @transform_5, window_bounds = array<i64: 8, 1>}, {pipeline_mode = #tpu.pipeline_mode<synchronous>, transform_indices = @transform_6, window_bounds = array<i64: 8, 1>}, {pipeline_mode = #tpu.pipeline_mode<synchronous>, transform_indices = @transform_7, window_bounds = array<i64: 8, 8>}, {pipeline_mode = #tpu.pipeline_mode<synchronous>, transform_indices = @transform_8, window_bounds = array<i64: 8, 1>}, {pipeline_mode = #tpu.pipeline_mode<synchronous>, transform_indices = @transform_9, window_bounds = array<i64: 3, 128>}, {transform_indices = @transform_10, window_bounds = array<i64: 1, 8, 128>}]} {
    %c0 = arith.constant 0 : index
    %c0_0 = arith.constant 0 : index
    %0 = vector.load %arg2[%c0, %c0_0] : memref<32x16xf32, #tpu.memory_space<vmem>>, vector<32x16xf32>
    %c0_1 = arith.constant 0 : index
    %c0_2 = arith.constant 0 : index
    %c0_3 = arith.constant 0 : index
    %1 = vector.load %arg1[%c0_1, %c0_2, %c0_3] : memref<1x16x128xbf16, #tpu.memory_space<vmem>>, vector<1x16x128xbf16>
    %2 = vector.shape_cast %1 : vector<1x16x128xbf16> to vector<16x128xbf16>
    %3 = arith.truncf %0 : vector<32x16xf32> to vector<32x16xbf16>
    %cst = arith.constant dense<0.000000e+00> : vector<32x128xf32>
    %4 = tpu.matmul %3, %2, %cst {dimension_numbers = #tpu.dot_dimension_numbers<[1], [0], [0], [1], [0, 0, 1, 1], [], []>} : vector<32x16xbf16>, vector<16x128xbf16>, vector<32x128xf32> -> vector<32x128xf32>
    %c0_4 = arith.constant 0 : index
    %c0_5 = arith.constant 0 : index
    %5 = vector.load %arg3[%c0_4, %c0_5] : memref<32x1xf32, #tpu.memory_space<vmem>>, vector<32x1xf32>
    %6 = vector.broadcast %5 : vector<32x1xf32> to vector<32x128xf32>
    %7 = arith.addf %4, %6 : vector<32x128xf32>
    %c0_6 = arith.constant 0 : index
    %c0_7 = arith.constant 0 : index
    %8 = vector.load %arg4[%c0_6, %c0_7] : memref<32x1xf32, #tpu.memory_space<vmem>>, vector<32x1xf32>
    %cst_8 = arith.constant 0.000000e+00 : f32
    %9 = vector.broadcast %cst_8 : f32 to vector<32x128xf32>
    %10 = arith.cmpf oge, %7, %9 : vector<32x128xf32>
    %11 = vector.broadcast %8 : vector<32x1xf32> to vector<32x128xf32>
    %12 = arith.mulf %7, %11 : vector<32x128xf32>
    %13 = arith.select %10, %7, %12 : vector<32x128xi1>, vector<32x128xf32>
    %14 = vector.extract_strided_slice %13 {offsets = [0, 0], sizes = [8, 128], strides = [1, 1]} : vector<32x128xf32> to vector<8x128xf32>
    %15 = vector.extract_strided_slice %13 {offsets = [8, 0], sizes = [8, 128], strides = [1, 1]} : vector<32x128xf32> to vector<8x128xf32>
    %16 = vector.extract_strided_slice %13 {offsets = [16, 0], sizes = [8, 128], strides = [1, 1]} : vector<32x128xf32> to vector<8x128xf32>
    %17 = vector.extract_strided_slice %13 {offsets = [24, 0], sizes = [8, 128], strides = [1, 1]} : vector<32x128xf32> to vector<8x128xf32>
    %c0_9 = arith.constant 0 : index
    %c0_10 = arith.constant 0 : index
    %18 = vector.load %arg10[%c0_9, %c0_10] : memref<3x128xf32, #tpu.memory_space<vmem>>, vector<3x128xf32>
    %19 = vector.extract_strided_slice %18 {offsets = [0, 0], sizes = [1, 128], strides = [1, 1]} : vector<3x128xf32> to vector<1x128xf32>
    %20 = vector.extract_strided_slice %18 {offsets = [1, 0], sizes = [1, 128], strides = [1, 1]} : vector<3x128xf32> to vector<1x128xf32>
    %21 = vector.extract_strided_slice %18 {offsets = [2, 0], sizes = [1, 128], strides = [1, 1]} : vector<3x128xf32> to vector<1x128xf32>
    %c0_11 = arith.constant 0 : index
    %c0_12 = arith.constant 0 : index
    %c0_13 = arith.constant 0 : index
    %22 = vector.load %arg5[%c0_11, %c0_12, %c0_13] : memref<9x8x1xf32, #tpu.memory_space<vmem>>, vector<9x8x1xf32>
    %23 = vector.extract_strided_slice %22 {offsets = [4, 0, 0], sizes = [1, 8, 1], strides = [1, 1, 1]} : vector<9x8x1xf32> to vector<1x8x1xf32>
    %24 = vector.shape_cast %23 : vector<1x8x1xf32> to vector<8x1xf32>
    %25 = vector.broadcast %24 : vector<8x1xf32> to vector<8x128xf32>
    %26 = arith.mulf %25, %14 : vector<8x128xf32>
    %27 = vector.extract_strided_slice %22 {offsets = [5, 0, 0], sizes = [1, 8, 1], strides = [1, 1, 1]} : vector<9x8x1xf32> to vector<1x8x1xf32>
    %28 = vector.shape_cast %27 : vector<1x8x1xf32> to vector<8x1xf32>
    %29 = vector.broadcast %28 : vector<8x1xf32> to vector<8x128xf32>
    %30 = arith.mulf %29, %15 : vector<8x128xf32>
    %31 = arith.addf %26, %30 : vector<8x128xf32>
    %32 = vector.extract_strided_slice %22 {offsets = [7, 0, 0], sizes = [1, 8, 1], strides = [1, 1, 1]} : vector<9x8x1xf32> to vector<1x8x1xf32>
    %33 = vector.shape_cast %32 : vector<1x8x1xf32> to vector<8x1xf32>
    %34 = vector.broadcast %33 : vector<8x1xf32> to vector<8x128xf32>
    %35 = arith.mulf %34, %16 : vector<8x128xf32>
    %36 = arith.addf %31, %35 : vector<8x128xf32>
    %37 = vector.extract_strided_slice %22 {offsets = [8, 0, 0], sizes = [1, 8, 1], strides = [1, 1, 1]} : vector<9x8x1xf32> to vector<1x8x1xf32>
    %38 = vector.shape_cast %37 : vector<1x8x1xf32> to vector<8x1xf32>
    %39 = vector.broadcast %38 : vector<8x1xf32> to vector<8x128xf32>
    %40 = arith.mulf %39, %17 : vector<8x128xf32>
    %41 = arith.addf %36, %40 : vector<8x128xf32>
    %42 = vector.extract_strided_slice %22 {offsets = [1, 0, 0], sizes = [1, 8, 1], strides = [1, 1, 1]} : vector<9x8x1xf32> to vector<1x8x1xf32>
    %43 = vector.shape_cast %42 : vector<1x8x1xf32> to vector<8x1xf32>
    %c8_i32 = arith.constant 8 : i32
    %44 = tpu.dynamic_rotate %16 by %c8_i32 dim 1 : vector<8x128xf32>, i32 -> vector<8x128xf32>
    %45 = vector.broadcast %43 : vector<8x1xf32> to vector<8x128xf32>
    %46 = arith.mulf %45, %44 : vector<8x128xf32>
    %47 = vector.extract_strided_slice %22 {offsets = [2, 0, 0], sizes = [1, 8, 1], strides = [1, 1, 1]} : vector<9x8x1xf32> to vector<1x8x1xf32>
    %48 = vector.shape_cast %47 : vector<1x8x1xf32> to vector<8x1xf32>
    %c8_i32_14 = arith.constant 8 : i32
    %49 = tpu.dynamic_rotate %17 by %c8_i32_14 dim 1 : vector<8x128xf32>, i32 -> vector<8x128xf32>
    %50 = vector.broadcast %48 : vector<8x1xf32> to vector<8x128xf32>
    %51 = arith.mulf %50, %49 : vector<8x128xf32>
    %52 = arith.addf %46, %51 : vector<8x128xf32>
    %53 = vector.broadcast %20 : vector<1x128xf32> to vector<8x128xf32>
    %54 = arith.mulf %52, %53 : vector<8x128xf32>
    %55 = vector.extract_strided_slice %22 {offsets = [3, 0, 0], sizes = [1, 8, 1], strides = [1, 1, 1]} : vector<9x8x1xf32> to vector<1x8x1xf32>
    %56 = vector.shape_cast %55 : vector<1x8x1xf32> to vector<8x1xf32>
    %c1_i32 = arith.constant 1 : i32
    %57 = tpu.dynamic_rotate %15 by %c1_i32 dim 1 : vector<8x128xf32>, i32 -> vector<8x128xf32>
    %58 = vector.broadcast %56 : vector<8x1xf32> to vector<8x128xf32>
    %59 = arith.mulf %58, %57 : vector<8x128xf32>
    %60 = vector.extract_strided_slice %22 {offsets = [6, 0, 0], sizes = [1, 8, 1], strides = [1, 1, 1]} : vector<9x8x1xf32> to vector<1x8x1xf32>
    %61 = vector.shape_cast %60 : vector<1x8x1xf32> to vector<8x1xf32>
    %c1_i32_15 = arith.constant 1 : i32
    %62 = tpu.dynamic_rotate %17 by %c1_i32_15 dim 1 : vector<8x128xf32>, i32 -> vector<8x128xf32>
    %63 = vector.broadcast %61 : vector<8x1xf32> to vector<8x128xf32>
    %64 = arith.mulf %63, %62 : vector<8x128xf32>
    %65 = arith.addf %59, %64 : vector<8x128xf32>
    %66 = vector.broadcast %19 : vector<1x128xf32> to vector<8x128xf32>
    %67 = arith.mulf %65, %66 : vector<8x128xf32>
    %68 = vector.extract_strided_slice %22 {offsets = [0, 0, 0], sizes = [1, 8, 1], strides = [1, 1, 1]} : vector<9x8x1xf32> to vector<1x8x1xf32>
    %69 = vector.shape_cast %68 : vector<1x8x1xf32> to vector<8x1xf32>
    %c9_i32 = arith.constant 9 : i32
    %70 = tpu.dynamic_rotate %17 by %c9_i32 dim 1 : vector<8x128xf32>, i32 -> vector<8x128xf32>
    %71 = vector.broadcast %69 : vector<8x1xf32> to vector<8x128xf32>
    %72 = arith.mulf %71, %70 : vector<8x128xf32>
    %73 = vector.broadcast %21 : vector<1x128xf32> to vector<8x128xf32>
    %74 = arith.mulf %72, %73 : vector<8x128xf32>
    %75 = arith.addf %41, %54 : vector<8x128xf32>
    %76 = arith.addf %67, %74 : vector<8x128xf32>
    %77 = arith.addf %75, %76 : vector<8x128xf32>
    %c0_16 = arith.constant 0 : index
    %c0_17 = arith.constant 0 : index
    %78 = vector.load %arg6[%c0_16, %c0_17] : memref<8x1xf32, #tpu.memory_space<vmem>>, vector<8x1xf32>
    %79 = vector.broadcast %78 : vector<8x1xf32> to vector<8x128xf32>
    %80 = arith.addf %77, %79 : vector<8x128xf32>
    %c0_18 = arith.constant 0 : index
    %c0_19 = arith.constant 0 : index
    %81 = vector.load %arg7[%c0_18, %c0_19] : memref<8x1xf32, #tpu.memory_space<vmem>>, vector<8x1xf32>
    %cst_20 = arith.constant 0.000000e+00 : f32
    %82 = vector.broadcast %cst_20 : f32 to vector<8x128xf32>
    %83 = arith.cmpf oge, %80, %82 : vector<8x128xf32>
    %84 = vector.broadcast %81 : vector<8x1xf32> to vector<8x128xf32>
    %85 = arith.mulf %80, %84 : vector<8x128xf32>
    %86 = arith.select %83, %80, %85 : vector<8x128xi1>, vector<8x128xf32>
    %c0_21 = arith.constant 0 : index
    %c0_22 = arith.constant 0 : index
    %87 = vector.load %arg8[%c0_21, %c0_22] : memref<8x8xf32, #tpu.memory_space<vmem>>, vector<8x8xf32>
    %88 = arith.truncf %87 : vector<8x8xf32> to vector<8x8xbf16>
    %89 = arith.truncf %86 : vector<8x128xf32> to vector<8x128xbf16>
    %cst_23 = arith.constant dense<0.000000e+00> : vector<8x128xf32>
    %90 = tpu.matmul %88, %89, %cst_23 {dimension_numbers = #tpu.dot_dimension_numbers<[1], [0], [0], [1], [0, 0, 1, 1], [], []>} : vector<8x8xbf16>, vector<8x128xbf16>, vector<8x128xf32> -> vector<8x128xf32>
    %c0_24 = arith.constant 0 : index
    %c0_25 = arith.constant 0 : index
    %91 = vector.load %arg9[%c0_24, %c0_25] : memref<8x1xf32, #tpu.memory_space<vmem>>, vector<8x1xf32>
    %92 = vector.broadcast %91 : vector<8x1xf32> to vector<8x128xf32>
    %93 = arith.addf %90, %92 : vector<8x128xf32>
    %94 = arith.truncf %93 : vector<8x128xf32> to vector<8x128xbf16>
    %c0_26 = arith.constant 0 : index
    %c0_27 = arith.constant 0 : index
    %c0_28 = arith.constant 0 : index
    %95 = vector.load %arg11[%c0_26, %c0_27, %c0_28] : memref<1x8x128xbf16, #tpu.memory_space<vmem>>, vector<1x8x128xbf16>
    %96 = vector.shape_cast %95 : vector<1x8x128xbf16> to vector<8x128xbf16>
    %97 = vector.shape_cast %94 : vector<8x128xbf16> to vector<1x8x128xbf16>
    tpu.vector_store %arg11[%c0_26, %c0_27, %c0_28], %97 {strides = array<i32>} : memref<1x8x128xbf16, #tpu.memory_space<vmem>>, vector<1x8x128xbf16>,
    return
  }
  func.func @transform_0(%arg0: i32) -> (i32, i32, i32) {
    %c0_i32 = arith.constant 0 : i32
    %c0_i32_0 = arith.constant 0 : i32
    %c0_i32_1 = arith.constant 0 : i32
    return %arg0, %c0_i32, %c0_i32_0 : i32, i32, i32
  }
  func.func @transform_1(%arg0: i32) -> (i32, i32) {
    %c0_i32 = arith.constant 0 : i32
    %c0_i32_0 = arith.constant 0 : i32
    %c0_i32_1 = arith.constant 0 : i32
    return %c0_i32, %c0_i32_0 : i32, i32
  }
  func.func @transform_2(%arg0: i32) -> (i32, i32) {
    %c0_i32 = arith.constant 0 : i32
    %c0_i32_0 = arith.constant 0 : i32
    %c0_i32_1 = arith.constant 0 : i32
    return %c0_i32, %c0_i32_0 : i32, i32
  }
  func.func @transform_3(%arg0: i32) -> (i32, i32) {
    %c0_i32 = arith.constant 0 : i32
    %c0_i32_0 = arith.constant 0 : i32
    %c0_i32_1 = arith.constant 0 : i32
    return %c0_i32, %c0_i32_0 : i32, i32
  }
  func.func @transform_4(%arg0: i32) -> (i32, i32, i32) {
    %c0_i32 = arith.constant 0 : i32
    %c0_i32_0 = arith.constant 0 : i32
    %c0_i32_1 = arith.constant 0 : i32
    %c0_i32_2 = arith.constant 0 : i32
    return %c0_i32, %c0_i32_0, %c0_i32_1 : i32, i32, i32
  }
  func.func @transform_5(%arg0: i32) -> (i32, i32) {
    %c0_i32 = arith.constant 0 : i32
    %c0_i32_0 = arith.constant 0 : i32
    %c0_i32_1 = arith.constant 0 : i32
    return %c0_i32, %c0_i32_0 : i32, i32
  }
  func.func @transform_6(%arg0: i32) -> (i32, i32) {
    %c0_i32 = arith.constant 0 : i32
    %c0_i32_0 = arith.constant 0 : i32
    %c0_i32_1 = arith.constant 0 : i32
    return %c0_i32, %c0_i32_0 : i32, i32
  }
  func.func @transform_7(%arg0: i32) -> (i32, i32) {
    %c0_i32 = arith.constant 0 : i32
    %c0_i32_0 = arith.constant 0 : i32
    %c0_i32_1 = arith.constant 0 : i32
    return %c0_i32, %c0_i32_0 : i32, i32
  }
  func.func @transform_8(%arg0: i32) -> (i32, i32) {
    %c0_i32 = arith.constant 0 : i32
    %c0_i32_0 = arith.constant 0 : i32
    %c0_i32_1 = arith.constant 0 : i32
    return %c0_i32, %c0_i32_0 : i32, i32
  }
  func.func @transform_9(%arg0: i32) -> (i32, i32) {
    %c0_i32 = arith.constant 0 : i32
    %c0_i32_0 = arith.constant 0 : i32
    %c0_i32_1 = arith.constant 0 : i32
    return %c0_i32, %c0_i32_0 : i32, i32
  }
  func.func @transform_10(%arg0: i32) -> (i32, i32, i32) {
    %c0_i32 = arith.constant 0 : i32
    %c0_i32_0 = arith.constant 0 : i32
    %c0_i32_1 = arith.constant 0 : i32
    return %arg0, %c0_i32, %c0_i32_0 : i32, i32, i32
  }
}

</mosaic_0001>

<llo_original>
// kernel: tpu_custom_call.1
$region0: #{tpu_custom_call.1}
  #allocation0 [shape = 'u32[]', space=smem, size = 0x4, offset = 0x4, fixed_abs, tag = 'smem constant byte address 0x4 - core index']
  #allocation1 [shape = 'u32[144,128]{1,0:T(1,128)}', space=vmem, size = 0x12000, scoped, tag = 'internal scratch']
  %s0 = inlined_call_operand.vmem [shape: bf16[2,16,128], index: 0, kind: input, shape index: {}]
  %s1 = inlined_call_operand.vmem [shape: f32[32,16], index: 1, kind: input, shape index: {}]
  %s2 = inlined_call_operand.vmem [shape: f32[32,1], index: 2, kind: input, shape index: {}]
  %s3 = inlined_call_operand.vmem [shape: f32[32,1], index: 3, kind: input, shape index: {}]
  %s4 = inlined_call_operand.vmem [shape: f32[9,8,1], index: 4, kind: input, shape index: {}]
  %s5 = inlined_call_operand.vmem [shape: f32[8,1], index: 5, kind: input, shape index: {}]
  %s6 = inlined_call_operand.vmem [shape: f32[8,1], index: 6, kind: input, shape index: {}]
  %s7 = inlined_call_operand.vmem [shape: f32[8,8], index: 7, kind: input, shape index: {}]
  %s8 = inlined_call_operand.vmem [shape: f32[8,1], index: 8, kind: input, shape index: {}]
  %s9 = inlined_call_operand.vmem [shape: f32[3,128], index: 9, kind: input, shape index: {}]
  %s10 = inlined_call_operand.hbm [shape: bf16[2,8,128], index: 10, kind: output, shape index: {}]
  %s11 = sld [smem:[#allocation0]]
  $region73: #{tpu_custom_call.1} parent=0
    _
  %s13 = ssub.s32 1, %s11
  %s14 = scalar_select 0, %s13, %s11
  $region1: #{tpu_custom_call.1} parent=0
    #allocation2 [shape = 'u8[4096]{0}', space=vmem, size = 0x1000, scoped, tag = 'output window, operand 0']
    #allocation3 [shape = 's32[2]{0}', space=sflag, size = 0x8, scoped, tag = 'scoped memory for tpu_custom_call.1']
    %15 = vsyncpa [#allocation3], 0
    %s16 = scalar_lea.sflag [#allocation3], 1
    %17 = vsyncpa %s16, 0
    loop: start=0, step=1, limit=4
    $region2: #{tpu_custom_call.1} parent=1 // loop_pre_header
      _
    $region3: #{tpu_custom_call.1} parent=1 // loop_header
      %s19 = sphi 0, %s23
      %p20 = scmp.ge.s32.totalorder %s19, 4
      %s29 = sphi 0, %s31
      %s32 = sphi 0, %s29
      %s33 = sphi 0, %s32
      %s49 = sphi 0, %s33
      %s53 = sphi 0, %s53
      %s55 = sphi 0, %s53
      %s56 = sphi 0, %s55
      %s70 = sphi 0, %s56
      %s74 = sphi 0, %s74
      %s76 = sphi 0, %s74
      %s77 = sphi 0, %s76
      %s91 = sphi 0, %s77
      %s95 = sphi 0, %s95
      %s97 = sphi 0, %s95
      %s98 = sphi 0, %s97
      %s112 = sphi 0, %s98
      %s116 = sphi 0, %s116
      %s118 = sphi 0, %s116
      %s119 = sphi 0, %s118
      %s133 = sphi 0, %s119
      %s137 = sphi 0, %s137
      %s139 = sphi 0, %s137
      %s140 = sphi 0, %s139
      %s154 = sphi 0, %s140
      %s158 = sphi 0, %s158
      %s160 = sphi 0, %s158
      %s161 = sphi 0, %s160
      %s175 = sphi 0, %s161
      %s179 = sphi 0, %s179
      %s181 = sphi 0, %s179
      %s182 = sphi 0, %s181
      %s196 = sphi 0, %s182
      %s200 = sphi 0, %s200
      %s202 = sphi 0, %s200
      %s203 = sphi 0, %s202
      %s217 = sphi 0, %s203
      %s221 = sphi 0, %s221
      %s223 = sphi 0, %s221
      %s224 = sphi 0, %s223
      %s238 = sphi 0, %s224
      %s244 = sphi 0, %s246
      %s247 = sphi 0, %s244
      %s248 = sphi 0, %s247
      %s264 = sphi 0, %s248
    $region4: #{tpu_custom_call.1} parent=1 // loop_header_branch
      %22 = sbr.rel (%p20) target = $region8
    $region5: #{tpu_custom_call.1} parent=1 // loop_body
      %s24 = ssub.s32 %s19, 1
      %s25 = ssub.s32 %s19, 2
      %s26 = sadd.s32 %s19, 1
      %s27 = ssub.s32 %s19, %s26
      %p28 = scmp.eq.s32.totalorder %s27, 0
      %s30 = sadd.s32 %s29, 1
      %s31 = scalar_select %p28, %s29, %s30
      %p34 = pneg %p28
      %p35 = scmp.eq.s32.totalorder %s19, 1
      %p36 = por %p34, %p35
      %p37 = scmp.ne.s32.totalorder %s29, %s32
      %p38 = scmp.eq.s32.totalorder %s19, 0
      %p39 = por %p37, %p38
      %p40 = scmp.ne.s32.totalorder %s29, %s32
      %p41 = scmp.eq.s32.totalorder %s24, 1
      %p42 = por %p40, %p41
      %p43 = scmp.ne.s32.totalorder %s32, %s33
      %p44 = scmp.eq.s32.totalorder %s24, 0
      %p45 = por %p43, %p44
      %p46 = scmp.ne.s32.totalorder %s32, %s33
      %p47 = scmp.eq.s32.totalorder %s25, 1
      %p48 = por %p46, %p47
      %p50 = scmp.ne.s32.totalorder %s33, %s49
      %p51 = scmp.eq.s32.totalorder %s25, 0
      %p52 = por %p50, %p51
      %s54 = sadd.s32 %s53, 1
      %p57 = scmp.eq.s32.totalorder %s19, 1
      %p58 = scmp.ne.s32.totalorder %s53, %s55
      %p59 = scmp.eq.s32.totalorder %s19, 0
      %p60 = por %p58, %p59
      %p61 = scmp.ne.s32.totalorder %s53, %s55
      %p62 = scmp.eq.s32.totalorder %s24, 1
      %p63 = por %p61, %p62
      %p64 = scmp.ne.s32.totalorder %s55, %s56
      %p65 = scmp.eq.s32.totalorder %s24, 0
      %p66 = por %p64, %p65
      %p67 = scmp.ne.s32.totalorder %s55, %s56
      %p68 = scmp.eq.s32.totalorder %s25, 1
      %p69 = por %p67, %p68
      %p71 = scmp.ne.s32.totalorder %s56, %s70
      %p72 = scmp.eq.s32.totalorder %s25, 0
      %p73 = por %p71, %p72
      %s75 = sadd.s32 %s74, 1
      %p78 = scmp.eq.s32.totalorder %s19, 1
      %p79 = scmp.ne.s32.totalorder %s74, %s76
      %p80 = scmp.eq.s32.totalorder %s19, 0
      %p81 = por %p79, %p80
      %p82 = scmp.ne.s32.totalorder %s74, %s76
      %p83 = scmp.eq.s32.totalorder %s24, 1
      %p84 = por %p82, %p83
      %p85 = scmp.ne.s32.totalorder %s76, %s77
      %p86 = scmp.eq.s32.totalorder %s24, 0
      %p87 = por %p85, %p86
      %p88 = scmp.ne.s32.totalorder %s76, %s77
      %p89 = scmp.eq.s32.totalorder %s25, 1
      %p90 = por %p88, %p89
      %p92 = scmp.ne.s32.totalorder %s77, %s91
      %p93 = scmp.eq.s32.totalorder %s25, 0
      %p94 = por %p92, %p93
      %s96 = sadd.s32 %s95, 1
      %p99 = scmp.eq.s32.totalorder %s19, 1
      %p100 = scmp.ne.s32.totalorder %s95, %s97
      %p101 = scmp.eq.s32.totalorder %s19, 0
      %p102 = por %p100, %p101
      %p103 = scmp.ne.s32.totalorder %s95, %s97
      %p104 = scmp.eq.s32.totalorder %s24, 1
      %p105 = por %p103, %p104
      %p106 = scmp.ne.s32.totalorder %s97, %s98
      %p107 = scmp.eq.s32.totalorder %s24, 0
      %p108 = por %p106, %p107
      %p109 = scmp.ne.s32.totalorder %s97, %s98
      %p110 = scmp.eq.s32.totalorder %s25, 1
      %p111 = por %p109, %p110
      %p113 = scmp.ne.s32.totalorder %s98, %s112
      %p114 = scmp.eq.s32.totalorder %s25, 0
      %p115 = por %p113, %p114
      %s117 = sadd.s32 %s116, 1
      %p120 = scmp.eq.s32.totalorder %s19, 1
      %p121 = scmp.ne.s32.totalorder %s116, %s118
      %p122 = scmp.eq.s32.totalorder %s19, 0
      %p123 = por %p121, %p122
      %p124 = scmp.ne.s32.totalorder %s116, %s118
      %p125 = scmp.eq.s32.totalorder %s24, 1
      %p126 = por %p124, %p125
      %p127 = scmp.ne.s32.totalorder %s118, %s119
      %p128 = scmp.eq.s32.totalorder %s24, 0
      %p129 = por %p127, %p128
      %p130 = scmp.ne.s32.totalorder %s118, %s119
      %p131 = scmp.eq.s32.totalorder %s25, 1
      %p132 = por %p130, %p131
      %p134 = scmp.ne.s32.totalorder %s119, %s133
      %p135 = scmp.eq.s32.totalorder %s25, 0
      %p136 = por %p134, %p135
      %s138 = sadd.s32 %s137, 1
      %p141 = scmp.eq.s32.totalorder %s19, 1
      %p142 = scmp.ne.s32.totalorder %s137, %s139
      %p143 = scmp.eq.s32.totalorder %s19, 0
      %p144 = por %p142, %p143
      %p145 = scmp.ne.s32.totalorder %s137, %s139
      %p146 = scmp.eq.s32.totalorder %s24, 1
      %p147 = por %p145, %p146
      %p148 = scmp.ne.s32.totalorder %s139, %s140
      %p149 = scmp.eq.s32.totalorder %s24, 0
      %p150 = por %p148, %p149
      %p151 = scmp.ne.s32.totalorder %s139, %s140
      %p152 = scmp.eq.s32.totalorder %s25, 1
      %p153 = por %p151, %p152
      %p155 = scmp.ne.s32.totalorder %s140, %s154
      %p156 = scmp.eq.s32.totalorder %s25, 0
      %p157 = por %p155, %p156
      %s159 = sadd.s32 %s158, 1
      %p162 = scmp.eq.s32.totalorder %s19, 1
      %p163 = scmp.ne.s32.totalorder %s158, %s160
      %p164 = scmp.eq.s32.totalorder %s19, 0
      %p165 = por %p163, %p164
      %p166 = scmp.ne.s32.totalorder %s158, %s160
      %p167 = scmp.eq.s32.totalorder %s24, 1
      %p168 = por %p166, %p167
      %p169 = scmp.ne.s32.totalorder %s160, %s161
      %p170 = scmp.eq.s32.totalorder %s24, 0
      %p171 = por %p169, %p170
      %p172 = scmp.ne.s32.totalorder %s160, %s161
      %p173 = scmp.eq.s32.totalorder %s25, 1
      %p174 = por %p172, %p173
      %p176 = scmp.ne.s32.totalorder %s161, %s175
      %p177 = scmp.eq.s32.totalorder %s25, 0
      %p178 = por %p176, %p177
      %s180 = sadd.s32 %s179, 1
      %p183 = scmp.eq.s32.totalorder %s19, 1
      %p184 = scmp.ne.s32.totalorder %s179, %s181
      %p185 = scmp.eq.s32.totalorder %s19, 0
      %p186 = por %p184, %p185
      %p187 = scmp.ne.s32.totalorder %s179, %s181
      %p188 = scmp.eq.s32.totalorder %s24, 1
      %p189 = por %p187, %p188
      %p190 = scmp.ne.s32.totalorder %s181, %s182
      %p191 = scmp.eq.s32.totalorder %s24, 0
      %p192 = por %p190, %p191
      %p193 = scmp.ne.s32.totalorder %s181, %s182
      %p194 = scmp.eq.s32.totalorder %s25, 1
      %p195 = por %p193, %p194
      %p197 = scmp.ne.s32.totalorder %s182, %s196
      %p198 = scmp.eq.s32.totalorder %s25, 0
      %p199 = por %p197, %p198
      %s201 = sadd.s32 %s200, 1
      %p204 = scmp.eq.s32.totalorder %s19, 1
      %p205 = scmp.ne.s32.totalorder %s200, %s202
      %p206 = scmp.eq.s32.totalorder %s19, 0
      %p207 = por %p205, %p206
      %p208 = scmp.ne.s32.totalorder %s200, %s202
      %p209 = scmp.eq.s32.totalorder %s24, 1
      %p210 = por %p208, %p209
      %p211 = scmp.ne.s32.totalorder %s202, %s203
      %p212 = scmp.eq.s32.totalorder %s24, 0
      %p213 = por %p211, %p212
      %p214 = scmp.ne.s32.totalorder %s202, %s203
      %p215 = scmp.eq.s32.totalorder %s25, 1
      %p216 = por %p214, %p215
      %p218 = scmp.ne.s32.totalorder %s203, %s217
      %p219 = scmp.eq.s32.totalorder %s25, 0
      %p220 = por %p218, %p219
      %s222 = sadd.s32 %s221, 1
      %p225 = scmp.eq.s32.totalorder %s19, 1
      %p226 = scmp.ne.s32.totalorder %s221, %s223
      %p227 = scmp.eq.s32.totalorder %s19, 0
      %p228 = por %p226, %p227
      %p229 = scmp.ne.s32.totalorder %s221, %s223
      %p230 = scmp.eq.s32.totalorder %s24, 1
      %p231 = por %p229, %p230
      %p232 = scmp.ne.s32.totalorder %s223, %s224
      %p233 = scmp.eq.s32.totalorder %s24, 0
      %p234 = por %p232, %p233
      %p235 = scmp.ne.s32.totalorder %s223, %s224
      %p236 = scmp.eq.s32.totalorder %s25, 1
      %p237 = por %p235, %p236
      %p239 = scmp.ne.s32.totalorder %s224, %s238
      %p240 = scmp.eq.s32.totalorder %s25, 0
      %p241 = por %p239, %p240
      %s242 = ssub.s32 %s19, %s26
      %p243 = scmp.eq.s32.totalorder %s242, 0
      %s245 = sadd.s32 %s244, 1
      %s246 = scalar_select %p243, %s244, %s245
      %p249 = pneg %p243
      %p250 = scmp.eq.s32.totalorder %s19, 1
      %p251 = por %p249, %p250
      %p252 = scmp.ne.s32.totalorder %s244, %s247
      %p253 = scmp.eq.s32.totalorder %s19, 0
      %p254 = por %p252, %p253
      %p255 = scmp.ne.s32.totalorder %s244, %s247
      %p256 = scmp.eq.s32.totalorder %s24, 1
      %p257 = por %p255, %p256
      %p258 = scmp.ne.s32.totalorder %s247, %s248
      %p259 = scmp.eq.s32.totalorder %s24, 0
      %p260 = por %p258, %p259
      %p261 = scmp.ne.s32.totalorder %s247, %s248
      %p262 = scmp.eq.s32.totalorder %s25, 1
      %p263 = por %p261, %p262
      %p265 = scmp.ne.s32.totalorder %s248, %s264
      %p266 = scmp.eq.s32.totalorder %s25, 0
      %p267 = por %p265, %p266
      %p268 = scmp.le.s32.totalorder 1, %s19
      %p269 = scmp.lt.s32.totalorder %s19, 3
      %p270 = pnand %p268, %p269
      %p271 = pneg %p270
      // Predicated region
      $region9: #{tpu_custom_call.1} parent=5 // pred_check
        _
      $region10: #{tpu_custom_call.1} parent=5 // pred_check_branch
        %273 = sbr.rel (%p270) target = $region12
      $region11: #{tpu_custom_call.1} parent=5 // pred_region
        %s274 = ssub.s32 %s19, 1
        // Predicated region
        $region13: #{tpu_custom_call.1} parent=11 // pred_check
          %p275 = pneg %p66
        $region14: #{tpu_custom_call.1} parent=11 // pred_check_branch
          %277 = sbr.rel (%p275) target = $region16
        $region15: #{tpu_custom_call.1} parent=11 // pred_region
          _
        $region16: #{tpu_custom_call.1} parent=11 // pred_fallthru
          _
        // Predicated region
        $region17: #{tpu_custom_call.1} parent=11 // pred_check
          %p278 = pneg %p87
        $region18: #{tpu_custom_call.1} parent=11 // pred_check_branch
          %280 = sbr.rel (%p278) target = $region20
        $region19: #{tpu_custom_call.1} parent=11 // pred_region
          _
        $region20: #{tpu_custom_call.1} parent=11 // pred_fallthru
          _
        // Predicated region
        $region21: #{tpu_custom_call.1} parent=11 // pred_check
          %p281 = pneg %p108
        $region22: #{tpu_custom_call.1} parent=11 // pred_check_branch
          %283 = sbr.rel (%p281) target = $region24
        $region23: #{tpu_custom_call.1} parent=11 // pred_region
          _
        $region24: #{tpu_custom_call.1} parent=11 // pred_fallthru
          _
        // Predicated region
        $region25: #{tpu_custom_call.1} parent=11 // pred_check
          %p284 = pneg %p129
        $region26: #{tpu_custom_call.1} parent=11 // pred_check_branch
          %286 = sbr.rel (%p284) target = $region28
        $region27: #{tpu_custom_call.1} parent=11 // pred_region
          _
        $region28: #{tpu_custom_call.1} parent=11 // pred_fallthru
          _
        // Predicated region
        $region29: #{tpu_custom_call.1} parent=11 // pred_check
          %p287 = pneg %p150
        $region30: #{tpu_custom_call.1} parent=11 // pred_check_branch
          %289 = sbr.rel (%p287) target = $region32
        $region31: #{tpu_custom_call.1} parent=11 // pred_region
          _
        $region32: #{tpu_custom_call.1} parent=11 // pred_fallthru
          _
        // Predicated region
        $region33: #{tpu_custom_call.1} parent=11 // pred_check
          %p290 = pneg %p171
        $region34: #{tpu_custom_call.1} parent=11 // pred_check_branch
          %292 = sbr.rel (%p290) target = $region36
        $region35: #{tpu_custom_call.1} parent=11 // pred_region
          _
        $region36: #{tpu_custom_call.1} parent=11 // pred_fallthru
          _
        // Predicated region
        $region37: #{tpu_custom_call.1} parent=11 // pred_check
          %p293 = pneg %p192
        $region38: #{tpu_custom_call.1} parent=11 // pred_check_branch
          %295 = sbr.rel (%p293) target = $region40
        $region39: #{tpu_custom_call.1} parent=11 // pred_region
          _
        $region40: #{tpu_custom_call.1} parent=11 // pred_fallthru
          _
        // Predicated region
        $region41: #{tpu_custom_call.1} parent=11 // pred_check
          %p296 = pneg %p213
        $region42: #{tpu_custom_call.1} parent=11 // pred_check_branch
          %298 = sbr.rel (%p296) target = $region44
        $region43: #{tpu_custom_call.1} parent=11 // pred_region
          _
        $region44: #{tpu_custom_call.1} parent=11 // pred_fallthru
          _
        // Predicated region
        $region45: #{tpu_custom_call.1} parent=11 // pred_check
          %p299 = pneg %p234
        $region46: #{tpu_custom_call.1} parent=11 // pred_check_branch
          %301 = sbr.rel (%p299) target = $region48
        $region47: #{tpu_custom_call.1} parent=11 // pred_region
          _
        $region48: #{tpu_custom_call.1} parent=11 // pred_fallthru
          _
      $region12: #{tpu_custom_call.1} parent=5 // pred_fallthru
        _
      %p302 = scmp.lt.s32.totalorder %s19, 2
      // Predicated region
      $region49: #{tpu_custom_call.1} parent=5 // pred_check
        %p303 = pneg %p302
      $region50: #{tpu_custom_call.1} parent=5 // pred_check_branch
        %305 = sbr.rel (%p303) target = $region52
      $region51: #{tpu_custom_call.1} parent=5 // pred_region
        // Predicated region
        $region53: #{tpu_custom_call.1} parent=51 // pred_check
          %p306 = pneg %p39
        $region54: #{tpu_custom_call.1} parent=51 // pred_check_branch
          %308 = sbr.rel (%p306) target = $region56
        $region55: #{tpu_custom_call.1} parent=51 // pred_region
          %p309 = scmp.lt.s32.totalorder %s19, 1
          %s310 = scalar_select %p309, %s19, 1
          %s311 = smul.addr %s310, 2
          %s312 = smul.addr %s311, 4
          %s313 = scalar_lea.vmem %s0, %s312
        $region56: #{tpu_custom_call.1} parent=51 // pred_fallthru
          _
      $region52: #{tpu_custom_call.1} parent=5 // pred_fallthru
        _
      %p314 = scmp.le.s32.totalorder 1, %s19
      %p315 = scmp.lt.s32.totalorder %s19, 3
      %p316 = pnand %p314, %p315
      %p317 = pneg %p316
      // Predicated region
      $region57: #{tpu_custom_call.1} parent=5 // pred_check
        _
      $region58: #{tpu_custom_call.1} parent=5 // pred_check_branch
        %319 = sbr.rel (%p316) target = $region60
      $region59: #{tpu_custom_call.1} parent=5 // pred_region
        %s320 = ssub.s32 %s19, 1
        %p321 = scmp.lt.s32.totalorder %s24, 1
        %s322 = scalar_select %p321, %s24, 1
        %s323 = smul.addr %s322, 2
        %s324 = smul.addr %s323, 4
        %s325 = scalar_lea.vmem %s0, %s324
        %p326 = pneg %p45
        %p327 = pneg %p42
        %p328 = pneg %p66
        %p329 = pneg %p63
        %p330 = pneg %p87
        %p331 = pneg %p84
        %p332 = pneg %p108
        %p333 = pneg %p105
        %p334 = pneg %p129
        %p335 = pneg %p126
        %p336 = pneg %p150
        %p337 = pneg %p147
        %p338 = pneg %p171
        %p339 = pneg %p168
        %p340 = pneg %p192
        %p341 = pneg %p189
        %p342 = pneg %p213
        %p343 = pneg %p210
        %p344 = pneg %p234
        %p345 = pneg %p231
        %p346 = pneg %p260
        %p347 = pneg %p257
        %s348 = sand.u32 %s247, 1
        %s349 = scalar_lea.sflag [#allocation3], %s348
        %s350 = sand.u32 %s247, 1
        %s351 = smul.addr %s350, 4
        %s352 = scalar_lea.vmem [#allocation2], %s351
        %p353 = scmp.lt.s32.totalorder %s24, 1
        %s354 = scalar_select %p353, %s24, 1
        %s355 = smul.addr %s354, 2
        %s356 = smul.addr %s355, 4
        %s357 = scalar_lea.vmem %s0, %s356
        %v359 = vld [vmem:[%s1] sm:$0xff]
        %v360 = vld [vmem:[%s1 + $0x8] sm:$0xff]
        %v361 = vld [vmem:[%s1 + $0x10] sm:$0xff]
        %v362 = vld [vmem:[%s1 + $0x18] sm:$0xff]
        %v363 = vld [vmem:[%s357] sm:$0xf]
        %v364 = vld [vmem:[%s357 + $0x4] sm:$0xf]
        %v365 = vpack.c.bf16 %v360, %v359
        %v366 = vpack.c.bf16 %v362, %v361
        %v367 = vld [vmem:[%s2] sm:$0xff]
        %v368 = vld [vmem:[%s2 + $0x8] sm:$0xff]
        %v369 = vld [vmem:[%s2 + $0x10] sm:$0xff]
        %v370 = vld [vmem:[%s2 + $0x18] sm:$0xff]
        %372 = vset.pattern.permute.xlu0 0
        %373 = vperm.xlu0 %372, %v367
        %v374 = vpop.permute.xlu0 %373
        %377 = vset.pattern.permute.xlu0 0
        %378 = vperm.xlu0 %377, %v368
        %v379 = vpop.permute.xlu0 %378
        %382 = vset.pattern.permute.xlu0 0
        %383 = vperm.xlu0 %382, %v369
        %v384 = vpop.permute.xlu0 %383
        %387 = vset.pattern.permute.xlu0 0
        %388 = vperm.xlu0 %387, %v370
        %v389 = vpop.permute.xlu0 %388
        %v393 = vunpack.c.l.b16 %v363
        %v394 = vunpack.c.l.b16 %v364
        %v395 = vpack.c.b16 %v394, %v393
        %vm397 = vcmask 130048
        %v399 = vsel %vm397, %v365, 0
        %v402 = vsel %vm397, %v366, 0
        %404 = vmatprep.subr.bf16.mxu0 0
        %405 = vmatpush1.bf16.msra.mxu0 0
        %406 = vmatprep.subr.bf16.mxu0 0
        %407 = vmatpush1.bf16.msra.mxu0 0
        %408 = vmatprep.subr.bf16.mxu0 0
        %409 = vmatpush1.bf16.msra.mxu0 0
        %410 = vmatprep.subr.bf16.mxu0 0
        %411 = vmatpush1.bf16.msra.mxu0 0
        %412 = vmatprep.subr.bf16.mxu0 0
        %413 = vmatpush1.bf16.msra.mxu0 0
        %414 = vmatprep.subr.bf16.mxu0 0
        %415 = vmatpush1.bf16.msra.mxu0 0
        %416 = vmatprep.subr.bf16.mxu0 0
        %417 = vmatpush1.bf16.msra.mxu0 0
        %418 = vmatprep.subr.bf16.mxu0 0
        %419 = vmatpush1.bf16.msra.mxu0 %v395
        %420 = vmatprep.subr.bf16.mxu0 0
        %421 = vmatpush2.bf16.msra.mxu0 0
        %422 = vmatprep.subr.bf16.mxu0 0
        %423 = vmatpush2.bf16.msra.mxu0 0
        %424 = vmatprep.subr.bf16.mxu0 0
        %425 = vmatpush2.bf16.msra.mxu0 0
        %426 = vmatprep.subr.bf16.mxu0 0
        %427 = vmatpush2.bf16.msra.mxu0 0
        %428 = vmatprep.subr.bf16.mxu0 0
        %429 = vmatpush2.bf16.msra.mxu0 0
        %430 = vmatprep.subr.bf16.mxu0 0
        %431 = vmatpush2.bf16.msra.mxu0 0
        %432 = vmatprep.subr.bf16.mxu0 0
        %433 = vmatpush2.bf16.msra.mxu0 0
        %434 = vmatprep.subr.bf16.mxu0 0
        %435 = vmatpush2.bf16.msra.mxu0 0
        %436 = vmatprep.mubr.bf16.mxu0 0
        %437 = vmatmul.mubr.bf16.gmra.mxu0 %v399
        %v438 = vpop.f32.mrf.mxu0
        %v439 = vadd.f32 %v374, %v438
        %v440 = vpop.f32.mrf.mxu0
        %v441 = vpop.f32.mrf.mxu0
        %v442 = vadd.f32 %v379, %v441
        %v443 = vpop.f32.mrf.mxu0
        %444 = vmatprep.mubr.bf16.mxu0 0
        %445 = vmatmul.mubr.bf16.gmra.mxu0 %v402
        %v446 = vpop.f32.mrf.mxu0
        %v447 = vadd.f32 %v384, %v446
        %v448 = vpop.f32.mrf.mxu0
        %v449 = vpop.f32.mrf.mxu0
        %v450 = vadd.f32 %v389, %v449
        %v451 = vpop.f32.mrf.mxu0
        %452 = vdwg.mxu0
        %v453 = vld [vmem:[%s3] sm:$0xff]
        %v454 = vld [vmem:[%s3 + $0x8] sm:$0xff]
        %v455 = vld [vmem:[%s3 + $0x10] sm:$0xff]
        %v456 = vld [vmem:[%s3 + $0x18] sm:$0xff]
        %vm457 = vcmp.ge.f32.partialorder %v439, 0.0
        %vm458 = vcmp.ge.f32.partialorder %v442, 0.0
        %vm459 = vcmp.ge.f32.partialorder %v447, 0.0
        %vm460 = vcmp.ge.f32.partialorder %v450, 0.0
        %462 = vset.pattern.permute.xlu0 0
        %463 = vperm.xlu0 %462, %v453
        %v464 = vpop.permute.xlu0 %463
        %467 = vset.pattern.permute.xlu0 0
        %468 = vperm.xlu0 %467, %v454
        %v469 = vpop.permute.xlu0 %468
        %472 = vset.pattern.permute.xlu0 0
        %473 = vperm.xlu0 %472, %v455
        %v474 = vpop.permute.xlu0 %473
        %477 = vset.pattern.permute.xlu0 0
        %478 = vperm.xlu0 %477, %v456
        %v479 = vpop.permute.xlu0 %478
        %v481 = vmul.f32 %v439, %v464
        %v482 = vmul.f32 %v442, %v469
        %v483 = vmul.f32 %v447, %v474
        %v484 = vmul.f32 %v450, %v479
        %v485 = vsel %vm457, %v439, %v481
        %v486 = vsel %vm458, %v442, %v482
        %v487 = vsel %vm459, %v447, %v483
        %v488 = vsel %vm460, %v450, %v484
        %v489 = vld [vmem:[%s9] sm:$0x7]
        %v490 = vld [vmem:[%s4] sm:$0xff]
        %v491 = vld [vmem:[%s4 + $0x8] sm:$0xff]
        %v492 = vld [vmem:[%s4 + $0x10] sm:$0xff]
        %v493 = vld [vmem:[%s4 + $0x18] sm:$0xff]
        %v494 = vld [vmem:[%s4 + $0x20] sm:$0xff]
        %v495 = vld [vmem:[%s4 + $0x28] sm:$0xff]
        %v496 = vld [vmem:[%s4 + $0x30] sm:$0xff]
        %v497 = vld [vmem:[%s4 + $0x38] sm:$0xff]
        %v498 = vld [vmem:[%s4 + $0x40] sm:$0xff]
        %500 = vset.pattern.permute.xlu0 0
        %501 = vperm.xlu0 %500, %v494
        %v502 = vpop.permute.xlu0 %501
        %v504 = vmul.f32 %v502, %v485
        %506 = vset.pattern.permute.xlu0 0
        %507 = vperm.xlu0 %506, %v495
        %v508 = vpop.permute.xlu0 %507
        %v510 = vmul.f32 %v508, %v486
        %v511 = vadd.f32 %v504, %v510
        %513 = vset.pattern.permute.xlu0 0
        %514 = vperm.xlu0 %513, %v497
        %v515 = vpop.permute.xlu0 %514
        %v517 = vmul.f32 %v515, %v487
        %v518 = vadd.f32 %v511, %v517
        %520 = vset.pattern.permute.xlu0 0
        %521 = vperm.xlu0 %520, %v498
        %v522 = vpop.permute.xlu0 %521
        %v524 = vmul.f32 %v522, %v488
        %v525 = vadd.f32 %v518, %v524
        %526 = vrot.lane.b32.xlu0 %v487, 8
        %v527 = vpop.permute.xlu0 %526
        %529 = vset.pattern.permute.xlu0 0
        %530 = vperm.xlu0 %529, %v491
        %v531 = vpop.permute.xlu0 %530
        %v533 = vmul.f32 %v531, %v527
        %534 = vrot.lane.b32.xlu0 %v488, 8
        %v535 = vpop.permute.xlu0 %534
        %537 = vset.pattern.permute.xlu0 0
        %538 = vperm.xlu0 %537, %v492
        %v539 = vpop.permute.xlu0 %538
        %v541 = vmul.f32 %v539, %v535
        %v542 = vadd.f32 %v533, %v541
        %v543 = vlaneseq
        %v544 = vshrl.u32 %v543, 7
        %v545 = vsub.s32 1, %v544
        %v546 = vrot.slane %v489, %v545
        %v547 = vmul.f32 %v542, %v546
        %548 = vrot.lane.b32.xlu0 %v486, 1
        %v549 = vpop.permute.xlu0 %548
        %551 = vset.pattern.permute.xlu0 0
        %552 = vperm.xlu0 %551, %v493
        %v553 = vpop.permute.xlu0 %552
        %v555 = vmul.f32 %v553, %v549
        %556 = vrot.lane.b32.xlu0 %v488, 1
        %v557 = vpop.permute.xlu0 %556
        %559 = vset.pattern.permute.xlu0 0
        %560 = vperm.xlu0 %559, %v496
        %v561 = vpop.permute.xlu0 %560
        %v563 = vmul.f32 %v561, %v557
        %v564 = vadd.f32 %v555, %v563
        %v565 = vlaneseq
        %v566 = vshrl.u32 %v565, 7
        %v567 = vsub.s32 0, %v566
        %v568 = vrot.slane %v489, %v567
        %v569 = vmul.f32 %v564, %v568
        %570 = vrot.lane.b32.xlu0 %v488, 9
        %v571 = vpop.permute.xlu0 %570
        %573 = vset.pattern.permute.xlu0 0
        %574 = vperm.xlu0 %573, %v490
        %v575 = vpop.permute.xlu0 %574
        %v577 = vmul.f32 %v575, %v571
        %v578 = vlaneseq
        %v579 = vshrl.u32 %v578, 7
        %v580 = vsub.s32 2, %v579
        %v581 = vrot.slane %v489, %v580
        %v582 = vmul.f32 %v577, %v581
        %v583 = vadd.f32 %v525, %v547
        %v584 = vadd.f32 %v569, %v582
        %v585 = vadd.f32 %v583, %v584
        %v586 = vld [vmem:[%s5] sm:$0xff]
        %588 = vset.pattern.permute.xlu0 0
        %589 = vperm.xlu0 %588, %v586
        %v590 = vpop.permute.xlu0 %589
        %v592 = vadd.f32 %v585, %v590
        %v593 = vld [vmem:[%s6] sm:$0xff]
        %vm594 = vcmp.ge.f32.partialorder %v592, 0.0
        %596 = vset.pattern.permute.xlu0 0
        %597 = vperm.xlu0 %596, %v593
        %v598 = vpop.permute.xlu0 %597
        %v600 = vmul.f32 %v592, %v598
        %v601 = vsel %vm594, %v592, %v600
        %v602 = vld [vmem:[%s7] sm:$0xff]
        %v603 = vpack.c.bf16 %v602, %v602
        %v604 = vpack.c.bf16 %v601, %v601
        %v605 = vld [vmem:[%s8] sm:$0xff]
        %607 = vset.pattern.permute.xlu0 0
        %608 = vperm.xlu0 %607, %v605
        %v609 = vpop.permute.xlu0 %608
        %vm611 = vcmask 64512
        %v613 = vsel %vm611, %v603, 0
        %vm615 = vcmask 1043456
        %v617 = vsel %vm615, %v604, 0
        %619 = vmatprep.subr.bf16.mxu0 0
        %620 = vmatpush1.bf16.msra.mxu0 0
        %621 = vmatprep.subr.bf16.mxu0 0
        %622 = vmatpush1.bf16.msra.mxu0 0
        %623 = vmatprep.subr.bf16.mxu0 0
        %624 = vmatpush1.bf16.msra.mxu0 0
        %625 = vmatprep.subr.bf16.mxu0 0
        %626 = vmatpush1.bf16.msra.mxu0 0
        %627 = vmatprep.subr.bf16.mxu0 0
        %628 = vmatpush1.bf16.msra.mxu0 0
        %629 = vmatprep.subr.bf16.mxu0 0
        %630 = vmatpush1.bf16.msra.mxu0 0
        %631 = vmatprep.subr.bf16.mxu0 0
        %632 = vmatpush1.bf16.msra.mxu0 0
        %633 = vmatprep.subr.bf16.mxu0 0
        %634 = vmatpush1.bf16.msra.mxu0 %v617
        %635 = vmatprep.subr.bf16.mxu0 0
        %636 = vmatpush2.bf16.msra.mxu0 0
        %637 = vmatprep.subr.bf16.mxu0 0
        %638 = vmatpush2.bf16.msra.mxu0 0
        %639 = vmatprep.subr.bf16.mxu0 0
        %640 = vmatpush2.bf16.msra.mxu0 0
        %641 = vmatprep.subr.bf16.mxu0 0
        %642 = vmatpush2.bf16.msra.mxu0 0
        %643 = vmatprep.subr.bf16.mxu0 0
        %644 = vmatpush2.bf16.msra.mxu0 0
        %645 = vmatprep.subr.bf16.mxu0 0
        %646 = vmatpush2.bf16.msra.mxu0 0
        %647 = vmatprep.subr.bf16.mxu0 0
        %648 = vmatpush2.bf16.msra.mxu0 0
        %649 = vmatprep.subr.bf16.mxu0 0
        %650 = vmatpush2.bf16.msra.mxu0 0
        %651 = vmatprep.mubr.bf16.mxu0 0
        %652 = vmatmul.mubr.bf16.gmra.mxu0 %v613
        %v653 = vpop.f32.mrf.mxu0
        %v654 = vadd.f32 %v609, %v653
        %v655 = vpop.f32.mrf.mxu0
        %v656 = vpop.f32.mrf.mxu0
        %v657 = vpop.f32.mrf.mxu0
        %658 = vdwg.mxu0
        %v659 = vpack.c.bf16 %v654, %v654
        %660 = vst [vmem:[%s352] sm:$0xf] %v659
        %s661 = sand.u32 %s247, 1
        %s662 = scalar_lea.sflag [#allocation3], %s661
        %s663 = sand.u32 %s247, 1
        %s664 = smul.addr %s663, 4
        %s665 = scalar_lea.vmem [#allocation2], %s664
        // Predicated region
        $region61: #{tpu_custom_call.1} parent=59 // pred_check
          %p666 = pneg %p257
        $region62: #{tpu_custom_call.1} parent=59 // pred_check_branch
          %668 = sbr.rel (%p666) target = $region64
        $region63: #{tpu_custom_call.1} parent=59 // pred_region
          %s670 = ssub.s32 64, 64
          %671 = vsyncadd %s662, %s670
          %s672 = smul.addr %s24, 64
          %s673 = scalar_lea.hbm %s10, %s672
          %s675 = sshll.u32 %s665, 4
          %s676 = int_to_ptr.vmem [resolvable:$true] %s675
          %678 = dma.vmem_to_hbm [thread:$0]  %s676, 64, %s673, %s662
        $region64: #{tpu_custom_call.1} parent=59 // pred_fallthru
          _
      $region60: #{tpu_custom_call.1} parent=5 // pred_fallthru
        _
      %p679 = scmp.le.s32.totalorder 2, %s19
      // Predicated region
      $region65: #{tpu_custom_call.1} parent=5 // pred_check
        %p680 = pneg %p679
      $region66: #{tpu_custom_call.1} parent=5 // pred_check_branch
        %682 = sbr.rel (%p680) target = $region68
      $region67: #{tpu_custom_call.1} parent=5 // pred_region
        %s683 = ssub.s32 %s19, 2
        // Predicated region
        $region69: #{tpu_custom_call.1} parent=67 // pred_check
          %p684 = pneg %p263
        $region70: #{tpu_custom_call.1} parent=67 // pred_check_branch
          %686 = sbr.rel (%p684) target = $region72
        $region71: #{tpu_custom_call.1} parent=67 // pred_region
          %s687 = sand.u32 %s248, 1
          %s688 = scalar_lea.sflag [#allocation3], %s687
          %s689 = sand.u32 %s248, 1
          %s690 = smul.addr %s689, 4
          %s691 = scalar_lea.vmem [#allocation2], %s690
          %692 = dma.done %s688, 64
        $region72: #{tpu_custom_call.1} parent=67 // pred_fallthru
          _
      $region68: #{tpu_custom_call.1} parent=5 // pred_fallthru
        _
    $region6: #{tpu_custom_call.1} parent=1 // loop_footer
      %s23 = sadd.s32 1, %s19
    $region7: #{tpu_custom_call.1} parent=1 // loop_footer_branch
      %18 = sbr.rel target = $region3
    $region8: #{tpu_custom_call.1} parent=1 // loop_exit
      _
    %693 = vsyncpa [#allocation3], 1
    %s694 = scalar_lea.sflag [#allocation3], 1
    %695 = vsyncpa %s694, 1

</llo_original>
